<compile_context>
chip_gen: v7x
topology: tpu7x:2x2x1
jax: 0.10.0
libtpu: 0.0.40
codegen_flags: <defaults>
</compile_context>

<pallas_src>
import math

import jax
import jax.numpy as jnp
from jax.experimental import pallas as pl
from jax.experimental.pallas import tpu as pltpu


# ------------------------------- helpers ----------------------------------- #

def _round_up(x, m):
    return ((x + m - 1) // m) * m


def _vmem_limit_bytes():
    """Generation-aware VMEM budget: ~75% of physical VMEM (96 MiB on
    v5e/v6e's 128 MiB, 48 MiB on v7x's 64 MiB); conservative fallback when the
    query is unavailable (non-TPU / interpret environments)."""
    try:
        cap = int(pltpu.get_tpu_info().vmem_capacity_bytes)
        return max(32 * 1024 * 1024, (cap * 3) // 4)
    except Exception:
        return 48 * 1024 * 1024


def _pick_tn(total_pad, want_split, max_tn=512):
    """Largest 128-multiple divisor of total_pad, <= max_tn. When the batch
    axis has a single tile, cap at total_pad//2 so the grid still has >= 2
    parallel steps (keeps both v7x TensorCores busy)."""
    cap = max_tn
    if want_split and total_pad >= 256:
        cap = min(cap, total_pad // 2)
    best = 128
    t = 256
    while t <= min(cap, total_pad):
        if total_pad % t == 0:
            best = t
        t += 128
    return best


# ----------------------------- Pallas kernel ------------------------------- #

def _dfa_project_kernel(e_ref, b_ref, noise_ref, o_ref):
    """out = e @ B_scaled + noise_term  (all scaling pre-folded)."""
    acc = jnp.dot(e_ref[...], b_ref[...], preferred_element_type=jnp.float32)
    o_ref[...] = (acc + noise_ref[...].astype(jnp.float32)).astype(o_ref.dtype)


def dfa_project_all(e, B_scaled, noise):
    """Fused projection of the error batch through the concatenated B.

    e        : (N, E)          bf16 error batch
    B_scaled : (E, total_pad)  bf16, per-layer 128-padded, 1/sqrt(size) folded
    noise    : (N, total_pad)  bf16 precomputed noise term (already scaled)
    returns  : (N_pad, total_pad) f32 feedback (pad rows/cols are zero)
    """
    n, e_size = e.shape
    _, total_pad = B_scaled.shape

    tm = min(256, _round_up(n, 16))       # bf16 sublane packing; MXU M dim
    n_pad = _round_up(n, tm)
    tn = _pick_tn(total_pad, want_split=(n_pad // tm == 1))

    if n_pad != n:
        pad = ((0, n_pad - n), (0, 0))
        e = jnp.pad(e, pad)
        noise = jnp.pad(noise, pad)       # pad rows stay exactly zero

    # Column-tile axis OUTER, batch-tile axis INNER: the B column tile's block
    # index is constant across inner steps -> DMA'd once, B read from HBM
    # exactly once per backward; only the tiny e tile is re-streamed.
    grid = (total_pad // tn, n_pad // tm)

    cost = pl.CostEstimate(
        flops=2 * n_pad * e_size * total_pad,
        transcendentals=0,
        bytes_accessed=(e.size * e.dtype.itemsize
                        + B_scaled.size * B_scaled.dtype.itemsize
                        + noise.size * noise.dtype.itemsize
                        + 4 * n_pad * total_pad),
    )

    return pl.pallas_call(
        _dfa_project_kernel,
        out_shape=jax.ShapeDtypeStruct((n_pad, total_pad), jnp.float32),
        grid=grid,
        in_specs=[
            pl.BlockSpec((tm, e_size), lambda j, i: (i, 0)),   # e (tiny re-read)
            pl.BlockSpec((e_size, tn), lambda j, i: (0, j)),   # B (VMEM-resident)
            pl.BlockSpec((tm, tn), lambda j, i: (i, j)),       # noise term
        ],
        out_specs=pl.BlockSpec((tm, tn), lambda j, i: (i, j)),
        compiler_params=pltpu.CompilerParams(
            dimension_semantics=("parallel", "parallel"),
            vmem_limit_bytes=_vmem_limit_bytes(),
        ),
        cost_estimate=cost,
    )(e, B_scaled, noise)


# ------------------------------ Module wrapper ----------------------------- #

class DFALayer:
    """Minimal stand-in for a DFA-wrapped layer (only .size / .hook_fun used)."""

    def __init__(self, size):
        self.size = size
        self.hook_fun = None


class DFAOutput:
    def __init__(self, dfa_layers, error_mean, error_std, key):
        self.dfa_layers = dfa_layers
        self.error_mean = float(error_mean)
        self.error_std = float(error_std)
        self._key = key
        for i, dfa_layer in enumerate(self.dfa_layers):
            dfa_layer.hook_fun = self._generate_hook_fun(i)
        self.B_matrices = []
        self.B_e_list = [None for _ in enumerate(self.dfa_layers)]
        self.init = False

    def _generate_hook_fun(self, layer_num):
        def _hook_fun(_grad):
            return self.B_e_list[layer_num]
        return _hook_fun

    def _build_concat(self):
        sizes = [layer.size for layer in self.dfa_layers]
        blocks, scales, offsets, off = [], [], [], 0
        for B, s in zip(self.B_matrices, sizes):
            s_pad = _round_up(s, 128)          # lane-aligned per-layer block
            sc = jnp.full((1, s), 1.0 / math.sqrt(s), jnp.float32)
            if s_pad != s:
                B = jnp.pad(B, ((0, 0), (0, s_pad - s)))
                sc = jnp.pad(sc, ((0, 0), (0, s_pad - s)))
            blocks.append(B)
            scales.append(sc)
            offsets.append(off)
            off += s_pad
        B_cat = jnp.concatenate(blocks, axis=1)
        col_scale = jnp.concatenate(scales, axis=1)
        # Fold 1/sqrt(size) into B once; keep the dominant operand in bf16.
        self._B_scaled = (B_cat * col_scale).astype(jnp.bfloat16)
        self._col_scale = col_scale
        self._offsets = offsets
        self._total_pad = off
        self._backward_fn = self._make_backward_fn()

    def _make_backward_fn(self):
        sizes = [layer.size for layer in self.dfa_layers]
        offsets = list(self._offsets)
        mean, std = self.error_mean, self.error_std

        def _backward(e_vector, B_scaled, col_scale, key):
            n = e_vector.shape[0]
            total_pad = B_scaled.shape[1]
            # Global max|e| shared by all layers, folded into the noise term.
            scale_max = jnp.max(jnp.abs(e_vector)).astype(jnp.float32)
            z = jax.random.normal(key, (n, total_pad), dtype=jnp.float32)
            noise = (scale_max * (mean + std * z) * col_scale).astype(jnp.bfloat16)
            out = dfa_project_all(e_vector.astype(jnp.bfloat16), B_scaled, noise)
            return tuple(out[:n, off:off + s] for off, s in zip(offsets, sizes))

        return jax.jit(_backward)

    def forward(self, x):
        if not self.init:
            e_size = x.shape[1]
            for layer in self.dfa_layers:
                self._key, sub = jax.random.split(self._key)
                # torch.rand(...) * 2 - 1  ->  Uniform(-1, 1)
                self.B_matrices.append(
                    jax.random.uniform(sub, (e_size, layer.size),
                                       dtype=jnp.float32,
                                       minval=-1.0, maxval=1.0))
            self._build_concat()
            self.init = True
        # The autograd Function's forward is the identity: return the input
        # untouched (no pallas_call — a pure copy kernel is wasted HBM BW).
        return x

    def backward(self, e_vector):
        """Mirrors _DFAOutputFun.backward with one jitted fused projection."""
        self._key, sub = jax.random.split(self._key)
        outs = self._backward_fn(e_vector, self._B_scaled, self._col_scale, sub)
        for i, be in enumerate(outs):
            self.B_e_list[i] = be
        return e_vector


# ---------------------------------- Main ----------------------------------- #

if __name__ == "__main__":
    key = jax.random.PRNGKey(0)
    k_in, k_err, k_mod = jax.random.split(key, 3)

    batch, e_size = 8, 32
    layers = [DFALayer(64), DFALayer(128)]

    dfa_out = DFAOutput(layers, error_mean=0.0, error_std=0.05, key=k_mod)

    x = jax.random.normal(k_in, (batch, e_size), dtype=jnp.float32)

    # Forward: identity (exact module semantics) + lazy B-matrix init.
    y = dfa_out.forward(x)
    y = jax.block_until_ready(y)
    assert jnp.allclose(y, x), "forward must be identity"

    # Backward hot path: single jitted fused Pallas projection across layers.
    e_vec = jax.random.normal(k_err, (batch, e_size), dtype=jnp.float32)
    dfa_out.backward(e_vec)

    emax = float(jnp.max(jnp.abs(e_vec)))
    e_bf = e_vec.astype(jnp.bfloat16).astype(jnp.float32)
    for be, layer, off in zip(dfa_out.B_e_list, layers, dfa_out._offsets):
        be = jax.block_until_ready(be)
        assert be.shape == (batch, layer.size), be.shape
        # Deterministic part reproduced with the same bf16 operands the kernel
        # used; the residual is only the (bounded) Gaussian noise term.
        B_det = dfa_out._B_scaled[:, off:off + layer.size].astype(jnp.float32)
        ref = e_bf @ B_det
        noise_bound = emax * (abs(dfa_out.error_mean)
                              + 6.0 * dfa_out.error_std) / math.sqrt(layer.size)
        max_err = float(jnp.max(jnp.abs(be - ref)))
        assert max_err <= noise_bound + 1e-2, (max_err, noise_bound)

    print("KERNEL_OK")
</pallas_src>

<mosaic_0001>
module attributes {stable_mosaic.version = 11 : i64} {
  func.func @_dfa_project_kernel(%arg0: i32, %arg1: i32, %arg2: memref<16x32xbf16, #tpu.memory_space<vmem>>, %arg3: memref<32x128xbf16, #tpu.memory_space<vmem>>, %arg4: memref<16x128xbf16, #tpu.memory_space<vmem>>, %arg5: memref<16x128xf32, #tpu.memory_space<vmem>>) attributes {dimension_semantics = [#tpu.dimension_semantics<parallel>, #tpu.dimension_semantics<parallel>], iteration_bounds = array<i64: 2, 1>, scalar_prefetch = 0 : i64, scratch_operands = 0 : i64, tpu.core_type = #tpu.core_type<tc>, window_params = [{transform_indices = @transform_0, window_bounds = array<i64: 16, 32>}, {transform_indices = @transform_1, window_bounds = array<i64: 32, 128>}, {transform_indices = @transform_2, window_bounds = array<i64: 16, 128>}, {transform_indices = @transform_3, window_bounds = array<i64: 16, 128>}]} {
    %c0 = arith.constant 0 : index
    %c0_0 = arith.constant 0 : index
    %0 = vector.load %arg2[%c0, %c0_0] : memref<16x32xbf16, #tpu.memory_space<vmem>>, vector<16x32xbf16>
    %c0_1 = arith.constant 0 : index
    %c0_2 = arith.constant 0 : index
    %1 = vector.load %arg3[%c0_1, %c0_2] : memref<32x128xbf16, #tpu.memory_space<vmem>>, vector<32x128xbf16>
    %cst = arith.constant dense<0.000000e+00> : vector<16x128xf32>
    %2 = tpu.matmul %0, %1, %cst {dimension_numbers = #tpu.dot_dimension_numbers<[1], [0], [0], [1], [0, 0, 1, 1], [], []>} : vector<16x32xbf16>, vector<32x128xbf16>, vector<16x128xf32> -> vector<16x128xf32>
    %c0_3 = arith.constant 0 : index
    %c0_4 = arith.constant 0 : index
    %3 = vector.load %arg4[%c0_3, %c0_4] : memref<16x128xbf16, #tpu.memory_space<vmem>>, vector<16x128xbf16>
    %4 = arith.extf %3 : vector<16x128xbf16> to vector<16x128xf32>
    %5 = arith.addf %2, %4 : vector<16x128xf32>
    %c0_5 = arith.constant 0 : index
    %c0_6 = arith.constant 0 : index
    %6 = vector.load %arg5[%c0_5, %c0_6] : memref<16x128xf32, #tpu.memory_space<vmem>>, vector<16x128xf32>
    tpu.vector_store %arg5[%c0_5, %c0_6], %5 {strides = array<i32>} : memref<16x128xf32, #tpu.memory_space<vmem>>, vector<16x128xf32>,
    return
  }
  func.func @transform_0(%arg0: i32, %arg1: i32) -> (i32, i32) {
    %c0_i32 = arith.constant 0 : i32
    %c0_i32_0 = arith.constant 0 : i32
    return %arg1, %c0_i32 : i32, i32
  }
  func.func @transform_1(%arg0: i32, %arg1: i32) -> (i32, i32) {
    %c0_i32 = arith.constant 0 : i32
    %c0_i32_0 = arith.constant 0 : i32
    return %c0_i32, %arg0 : i32, i32
  }
  func.func @transform_2(%arg0: i32, %arg1: i32) -> (i32, i32) {
    %c0_i32 = arith.constant 0 : i32
    return %arg1, %arg0 : i32, i32
  }
  func.func @transform_3(%arg0: i32, %arg1: i32) -> (i32, i32) {
    %c0_i32 = arith.constant 0 : i32
    return %arg1, %arg0 : i32, i32
  }
}

</mosaic_0001>

<llo_original>
// kernel: _backward.1
$region0: #{_backward.1}
  #allocation0 [shape = 'u32[]', space=smem, size = 0x4, offset = 0x4, fixed_abs, tag = 'smem constant byte address 0x4 - core index']
  #allocation1 [shape = 'u32[144,128]{1,0:T(1,128)}', space=vmem, size = 0x12000, scoped, tag = 'internal scratch']
  %s0 = inlined_call_operand.vmem [shape: bf16[16,32], index: 0, kind: input, shape index: {}]
  %s1 = inlined_call_operand.vmem [shape: bf16[32,256], index: 1, kind: input, shape index: {}]
  %s2 = inlined_call_operand.vmem [shape: bf16[16,256], index: 2, kind: input, shape index: {}]
  %s3 = inlined_call_operand.vmem [shape: f32[16,256], index: 3, kind: output, shape index: {}]
  %s4 = sld [smem:[#allocation0]]
  $region161: #{_backward.1} parent=0
    _
  %s6 = ssub.s32 1, %s4
  %s7 = scalar_select 0, %s6, %s4
  $region1: #{_backward.1} parent=0
    #allocation2 [shape = 'u8[16384]{0}', space=vmem, size = 0x4000, scoped, tag = 'input window, operand 1']
    #allocation3 [shape = 'u8[8192]{0}', space=vmem, size = 0x2000, scoped, tag = 'input window, operand 2']
    #allocation4 [shape = 'u8[16384]{0}', space=vmem, size = 0x4000, scoped, tag = 'output window, operand 0']
    loop: start=0, step=1, limit=4
    $region2: #{_backward.1} parent=1 // loop_pre_header
      _
    $region3: #{_backward.1} parent=1 // loop_header
      %s9 = sphi 0, %s13
      %p10 = scmp.ge.s32.totalorder %s9, 4
      %s16 = sphi 0, %s28
      %s17 = sphi 0, %s24
      %s18 = sphi 0, %s16
      %s19 = sphi 0, %s17
      %s20 = sphi 0, %s18
      %s21 = sphi 0, %s19
      %s31 = sphi 0, %s33
      %s34 = sphi 0, %s31
      %s35 = sphi 0, %s34
      %s51 = sphi 0, %s35
      %s57 = sphi 0, %s59
      %s60 = sphi 0, %s57
      %s61 = sphi 0, %s60
      %s77 = sphi 0, %s61
      %s85 = sphi 0, %s87
      %s88 = sphi 0, %s85
      %s89 = sphi 0, %s88
      %s105 = sphi 0, %s89
      %s113 = sphi 0, %s115
      %s116 = sphi 0, %s113
      %s117 = sphi 0, %s116
      %s133 = sphi 0, %s117
    $region4: #{_backward.1} parent=1 // loop_header_branch
      %12 = sbr.rel (%p10) target = $region8
    $region5: #{_backward.1} parent=1 // loop_body
      %s14 = ssub.s32 %s9, 1
      %s15 = ssub.s32 %s9, 2
      %s22 = sadd.s32 1, %s17
      %p23 = scmp.ge.s32.totalorder %s22, 1
      %s24 = scalar_select %p23, 0, %s22
      %s25 = sadd.s32 1, %s16
      %s26 = scalar_select %p23, %s25, %s16
      %p27 = scmp.ge.s32.totalorder %s26, 2
      %s28 = scalar_select %p27, 0, %s26
      %s29 = ssub.s32 %s17, %s24
      %p30 = scmp.eq.s32.totalorder %s29, 0
      %s32 = sadd.s32 %s31, 1
      %s33 = scalar_select %p30, %s31, %s32
      %p36 = pneg %p30
      %p37 = scmp.eq.s32.totalorder %s9, 1
      %p38 = por %p36, %p37
      %p39 = scmp.ne.s32.totalorder %s31, %s34
      %p40 = scmp.eq.s32.totalorder %s9, 0
      %p41 = por %p39, %p40
      %p42 = scmp.ne.s32.totalorder %s31, %s34
      %p43 = scmp.eq.s32.totalorder %s14, 1
      %p44 = por %p42, %p43
      %p45 = scmp.ne.s32.totalorder %s34, %s35
      %p46 = scmp.eq.s32.totalorder %s14, 0
      %p47 = por %p45, %p46
      %p48 = scmp.ne.s32.totalorder %s34, %s35
      %p49 = scmp.eq.s32.totalorder %s15, 1
      %p50 = por %p48, %p49
      %p52 = scmp.ne.s32.totalorder %s35, %s51
      %p53 = scmp.eq.s32.totalorder %s15, 0
      %p54 = por %p52, %p53
      %s55 = ssub.s32 %s16, %s28
      %p56 = scmp.eq.s32.totalorder %s55, 0
      %s58 = sadd.s32 %s57, 1
      %s59 = scalar_select %p56, %s57, %s58
      %p62 = pneg %p56
      %p63 = scmp.eq.s32.totalorder %s9, 1
      %p64 = por %p62, %p63
      %p65 = scmp.ne.s32.totalorder %s57, %s60
      %p66 = scmp.eq.s32.totalorder %s9, 0
      %p67 = por %p65, %p66
      %p68 = scmp.ne.s32.totalorder %s57, %s60
      %p69 = scmp.eq.s32.totalorder %s14, 1
      %p70 = por %p68, %p69
      %p71 = scmp.ne.s32.totalorder %s60, %s61
      %p72 = scmp.eq.s32.totalorder %s14, 0
      %p73 = por %p71, %p72
      %p74 = scmp.ne.s32.totalorder %s60, %s61
      %p75 = scmp.eq.s32.totalorder %s15, 1
      %p76 = por %p74, %p75
      %p78 = scmp.ne.s32.totalorder %s61, %s77
      %p79 = scmp.eq.s32.totalorder %s15, 0
      %p80 = por %p78, %p79
      %s81 = ssub.s32 %s17, %s24
      %s82 = ssub.s32 %s16, %s28
      %s83 = sor.u32 %s81, %s82
      %p84 = scmp.eq.s32.totalorder %s83, 0
      %s86 = sadd.s32 %s85, 1
      %s87 = scalar_select %p84, %s85, %s86
      %p90 = pneg %p84
      %p91 = scmp.eq.s32.totalorder %s9, 1
      %p92 = por %p90, %p91
      %p93 = scmp.ne.s32.totalorder %s85, %s88
      %p94 = scmp.eq.s32.totalorder %s9, 0
      %p95 = por %p93, %p94
      %p96 = scmp.ne.s32.totalorder %s85, %s88
      %p97 = scmp.eq.s32.totalorder %s14, 1
      %p98 = por %p96, %p97
      %p99 = scmp.ne.s32.totalorder %s88, %s89
      %p100 = scmp.eq.s32.totalorder %s14, 0
      %p101 = por %p99, %p100
      %p102 = scmp.ne.s32.totalorder %s88, %s89
      %p103 = scmp.eq.s32.totalorder %s15, 1
      %p104 = por %p102, %p103
      %p106 = scmp.ne.s32.totalorder %s89, %s105
      %p107 = scmp.eq.s32.totalorder %s15, 0
      %p108 = por %p106, %p107
      %s109 = ssub.s32 %s17, %s24
      %s110 = ssub.s32 %s16, %s28
      %s111 = sor.u32 %s109, %s110
      %p112 = scmp.eq.s32.totalorder %s111, 0
      %s114 = sadd.s32 %s113, 1
      %s115 = scalar_select %p112, %s113, %s114
      %p118 = pneg %p112
      %p119 = scmp.eq.s32.totalorder %s9, 1
      %p120 = por %p118, %p119
      %p121 = scmp.ne.s32.totalorder %s113, %s116
      %p122 = scmp.eq.s32.totalorder %s9, 0
      %p123 = por %p121, %p122
      %p124 = scmp.ne.s32.totalorder %s113, %s116
      %p125 = scmp.eq.s32.totalorder %s14, 1
      %p126 = por %p124, %p125
      %p127 = scmp.ne.s32.totalorder %s116, %s117
      %p128 = scmp.eq.s32.totalorder %s14, 0
      %p129 = por %p127, %p128
      %p130 = scmp.ne.s32.totalorder %s116, %s117
      %p131 = scmp.eq.s32.totalorder %s15, 1
      %p132 = por %p130, %p131
      %p134 = scmp.ne.s32.totalorder %s117, %s133
      %p135 = scmp.eq.s32.totalorder %s15, 0
      %p136 = por %p134, %p135
      %p137 = scmp.le.s32.totalorder 1, %s9
      %p138 = scmp.lt.s32.totalorder %s9, 3
      %p139 = pnand %p137, %p138
      %p140 = pneg %p139
      // Predicated region
      $region9: #{_backward.1} parent=5 // pred_check
        _
      $region10: #{_backward.1} parent=5 // pred_check_branch
        %142 = sbr.rel (%p139) target = $region12
      $region11: #{_backward.1} parent=5 // pred_region
        %s143 = ssub.s32 %s9, 1
        // Predicated region
        $region13: #{_backward.1} parent=11 // pred_check
          %p144 = pneg %p47
        $region14: #{_backward.1} parent=11 // pred_check_branch
          %146 = sbr.rel (%p144) target = $region16
        $region15: #{_backward.1} parent=11 // pred_region
          %s147 = smul.u32 2, %s19
          %p148 = scmp.lt.s32.totalorder %s147, 1
          %s149 = scalar_select %p148, %s147, 1
          %s150 = smul.addr %s149, 4
          %s151 = scalar_lea.vmem %s0, %s150
          %s152 = smul.u32 2, %s19
        $region16: #{_backward.1} parent=11 // pred_fallthru
          _
      $region12: #{_backward.1} parent=5 // pred_fallthru
        _
      %p153 = scmp.lt.s32.totalorder %s9, 2
      // Predicated region
      $region17: #{_backward.1} parent=5 // pred_check
        %p154 = pneg %p153
      $region18: #{_backward.1} parent=5 // pred_check_branch
        %156 = sbr.rel (%p154) target = $region20
      $region19: #{_backward.1} parent=5 // pred_region
        // Predicated region
        $region21: #{_backward.1} parent=19 // pred_check
          %p157 = pneg %p67
        $region22: #{_backward.1} parent=19 // pred_check_branch
          %159 = sbr.rel (%p157) target = $region24
        $region23: #{_backward.1} parent=19 // pred_region
          %s160 = sand.u32 %s57, 1
          %s161 = sand.u32 %s57, 1
          %s162 = smul.addr %s161, 16
          %s163 = scalar_lea.vmem [#allocation2], %s162
          %s164 = smul.addr %s16, 4
          %s165 = scalar_lea.vmem %s1, %s164
          // Predicated region
          $region25: #{_backward.1} parent=23 // pred_check
            _
          $region26: #{_backward.1} parent=23 // pred_check_branch
            %167 = sbr.rel (0) target = $region28
          $region27: #{_backward.1} parent=23 // pred_region
            // Predicated region
            $region29: #{_backward.1} parent=27 // pred_check
              _
            $region30: #{_backward.1} parent=27 // pred_check_branch
              %169 = sbr.rel target = $region32
            $region31: #{_backward.1} parent=27 // pred_region
              // Predicated region
              $region44: #{_backward.1} parent=31 // pred_check
                _
              $region45: #{_backward.1} parent=31 // pred_check_branch
                %190 = sbr.rel (0) target = $region47
              $region46: #{_backward.1} parent=31 // pred_region
                loop: start=0, step=1, limit=1
                $region48: #{_backward.1} parent=46 // loop_pre_header
                  _
                $region49: #{_backward.1} parent=46 // loop_header
                  %s192 = sphi 0, %s196
                  %p193 = scmp.ge.s32.totalorder %s192, 1
                  %s197 = sphi %s165, %s165
                  %s198 = sphi %s163, %s163
                $region50: #{_backward.1} parent=46 // loop_header_branch
                  %195 = sbr.rel (%p193) target = $region54
                $region51: #{_backward.1} parent=46 // loop_body
                  _
                $region52: #{_backward.1} parent=46 // loop_footer
                  %s196 = sadd.s32 1, %s192
                $region53: #{_backward.1} parent=46 // loop_footer_branch
                  %191 = sbr.rel target = $region49
                $region54: #{_backward.1} parent=46 // loop_exit
                  _
                loop: start=0, step=1, limit=1
                $region55: #{_backward.1} parent=46 // loop_pre_header
                  _
                $region56: #{_backward.1} parent=46 // loop_header
                  %s201 = sphi 0, %s205
                  %p202 = scmp.ge.s32.totalorder %s201, 1
                  %s206 = sphi %s165, %s165
                  %s207 = sphi %s163, %s163
                $region57: #{_backward.1} parent=46 // loop_header_branch
                  %204 = sbr.rel (%p202) target = $region61
                $region58: #{_backward.1} parent=46 // loop_body
                  %v208 = vld [vmem:[%s206] sm:$0xf]
                  %209 = vst [vmem:[%s207] sm:$0xf] %v208
                  %v210 = vld [vmem:[%s206 + $0x8] sm:$0xf]
                  %211 = vst [vmem:[%s207 + $0x4] sm:$0xf] %v210
                  %v212 = vld [vmem:[%s206 + $0x10] sm:$0xf]
                  %213 = vst [vmem:[%s207 + $0x8] sm:$0xf] %v212
                  %v214 = vld [vmem:[%s206 + $0x18] sm:$0xf]
                  %215 = vst [vmem:[%s207 + $0xc] sm:$0xf] %v214
                $region59: #{_backward.1} parent=46 // loop_footer
                  %s205 = sadd.s32 1, %s201
                $region60: #{_backward.1} parent=46 // loop_footer_branch
                  %200 = sbr.rel target = $region56
                $region61: #{_backward.1} parent=46 // loop_exit
                  _
              $region47: #{_backward.1} parent=31 // pred_fallthru
                _
            $region32: #{_backward.1} parent=27 // pred_fallthru
              _
            // Predicated region
            $region33: #{_backward.1} parent=27 // pred_check
              _
            $region34: #{_backward.1} parent=27 // pred_check_branch
              %171 = sbr.rel (0) target = $region36
            $region35: #{_backward.1} parent=27 // pred_region
              loop: start=0, step=1, limit=1
              $region37: #{_backward.1} parent=35 // loop_pre_header
                _
              $region38: #{_backward.1} parent=35 // loop_header
                %s174 = sphi 0, %s178
                %p175 = scmp.ge.s32.totalorder %s174, 1
                %s179 = sphi %s165, %s165
                %s180 = sphi %s163, %s163
              $region39: #{_backward.1} parent=35 // loop_header_branch
                %177 = sbr.rel (%p175) target = $region43
              $region40: #{_backward.1} parent=35 // loop_body
                %v181 = vld [vmem:[%s179] sm:$0xf]
                %182 = vst [vmem:[%s180] sm:$0xf] %v181
                %v183 = vld [vmem:[%s179 + $0x8] sm:$0xf]
                %184 = vst [vmem:[%s180 + $0x4] sm:$0xf] %v183
                %v185 = vld [vmem:[%s179 + $0x10] sm:$0xf]
                %186 = vst [vmem:[%s180 + $0x8] sm:$0xf] %v185
                %v187 = vld [vmem:[%s179 + $0x18] sm:$0xf]
                %188 = vst [vmem:[%s180 + $0xc] sm:$0xf] %v187
              $region41: #{_backward.1} parent=35 // loop_footer
                %s178 = sadd.s32 1, %s174
              $region42: #{_backward.1} parent=35 // loop_footer_branch
                %173 = sbr.rel target = $region38
              $region43: #{_backward.1} parent=35 // loop_exit
                _
            $region36: #{_backward.1} parent=27 // pred_fallthru
              _
          $region28: #{_backward.1} parent=23 // pred_fallthru
            _
          %216 = vnop
        $region24: #{_backward.1} parent=19 // pred_fallthru
          _
        // Predicated region
        $region62: #{_backward.1} parent=19 // pred_check
          %p217 = pneg %p95
        $region63: #{_backward.1} parent=19 // pred_check_branch
          %219 = sbr.rel (%p217) target = $region65
        $region64: #{_backward.1} parent=19 // pred_region
          %s220 = sand.u32 %s85, 1
          %s221 = sand.u32 %s85, 1
          %s222 = smul.addr %s221, 8
          %s223 = scalar_lea.vmem [#allocation3], %s222
          %s224 = smul.u32 2, %s17
          %s225 = smul.addr %s224, 2
          %s226 = sadd.s32 %s16, %s225
          %s227 = smul.addr %s226, 4
          %s228 = scalar_lea.vmem %s2, %s227
          // Predicated region
          $region66: #{_backward.1} parent=64 // pred_check
            _
          $region67: #{_backward.1} parent=64 // pred_check_branch
            %230 = sbr.rel (0) target = $region69
          $region68: #{_backward.1} parent=64 // pred_region
            // Predicated region
            $region70: #{_backward.1} parent=68 // pred_check
              _
            $region71: #{_backward.1} parent=68 // pred_check_branch
              %232 = sbr.rel target = $region73
            $region72: #{_backward.1} parent=68 // pred_region
              // Predicated region
              $region85: #{_backward.1} parent=72 // pred_check
                _
              $region86: #{_backward.1} parent=72 // pred_check_branch
                %249 = sbr.rel (0) target = $region88
              $region87: #{_backward.1} parent=72 // pred_region
                loop: start=0, step=1, limit=1
                $region89: #{_backward.1} parent=87 // loop_pre_header
                  _
                $region90: #{_backward.1} parent=87 // loop_header
                  %s251 = sphi 0, %s255
                  %p252 = scmp.ge.s32.totalorder %s251, 1
                  %s256 = sphi %s228, %s228
                  %s257 = sphi %s223, %s223
                $region91: #{_backward.1} parent=87 // loop_header_branch
                  %254 = sbr.rel (%p252) target = $region95
                $region92: #{_backward.1} parent=87 // loop_body
                  _
                $region93: #{_backward.1} parent=87 // loop_footer
                  %s255 = sadd.s32 1, %s251
                $region94: #{_backward.1} parent=87 // loop_footer_branch
                  %250 = sbr.rel target = $region90
                $region95: #{_backward.1} parent=87 // loop_exit
                  _
                loop: start=0, step=1, limit=1
                $region96: #{_backward.1} parent=87 // loop_pre_header
                  _
                $region97: #{_backward.1} parent=87 // loop_header
                  %s260 = sphi 0, %s264
                  %p261 = scmp.ge.s32.totalorder %s260, 1
                  %s265 = sphi %s228, %s228
                  %s266 = sphi %s223, %s223
                $region98: #{_backward.1} parent=87 // loop_header_branch
                  %263 = sbr.rel (%p261) target = $region102
                $region99: #{_backward.1} parent=87 // loop_body
                  %v267 = vld [vmem:[%s265] sm:$0xf]
                  %268 = vst [vmem:[%s266] sm:$0xf] %v267
                  %v269 = vld [vmem:[%s265 + $0x8] sm:$0xf]
                  %270 = vst [vmem:[%s266 + $0x4] sm:$0xf] %v269
                $region100: #{_backward.1} parent=87 // loop_footer
                  %s264 = sadd.s32 1, %s260
                $region101: #{_backward.1} parent=87 // loop_footer_branch
                  %259 = sbr.rel target = $region97
                $region102: #{_backward.1} parent=87 // loop_exit
                  _
              $region88: #{_backward.1} parent=72 // pred_fallthru
                _
            $region73: #{_backward.1} parent=68 // pred_fallthru
              _
            // Predicated region
            $region74: #{_backward.1} parent=68 // pred_check
              _
            $region75: #{_backward.1} parent=68 // pred_check_branch
              %234 = sbr.rel (0) target = $region77
            $region76: #{_backward.1} parent=68 // pred_region
              loop: start=0, step=1, limit=1
              $region78: #{_backward.1} parent=76 // loop_pre_header
                _
              $region79: #{_backward.1} parent=76 // loop_header
                %s237 = sphi 0, %s241
                %p238 = scmp.ge.s32.totalorder %s237, 1
                %s242 = sphi %s228, %s228
                %s243 = sphi %s223, %s223
              $region80: #{_backward.1} parent=76 // loop_header_branch
                %240 = sbr.rel (%p238) target = $region84
              $region81: #{_backward.1} parent=76 // loop_body
                %v244 = vld [vmem:[%s242] sm:$0xf]
                %245 = vst [vmem:[%s243] sm:$0xf] %v244
                %v246 = vld [vmem:[%s242 + $0x8] sm:$0xf]
                %247 = vst [vmem:[%s243 + $0x4] sm:$0xf] %v246
              $region82: #{_backward.1} parent=76 // loop_footer
                %s241 = sadd.s32 1, %s237
              $region83: #{_backward.1} parent=76 // loop_footer_branch
                %236 = sbr.rel target = $region79
              $region84: #{_backward.1} parent=76 // loop_exit
                _
            $region77: #{_backward.1} parent=68 // pred_fallthru
              _
          $region69: #{_backward.1} parent=64 // pred_fallthru
            _
          %271 = vnop
        $region65: #{_backward.1} parent=19 // pred_fallthru
          _
      $region20: #{_backward.1} parent=5 // pred_fallthru
        _
      %p272 = scmp.le.s32.totalorder 1, %s9
      %p273 = scmp.lt.s32.totalorder %s9, 3
      %p274 = pnand %p272, %p273
      %p275 = pneg %p274
      // Predicated region
      $region103: #{_backward.1} parent=5 // pred_check
        _
      $region104: #{_backward.1} parent=5 // pred_check_branch
        %277 = sbr.rel (%p274) target = $region106
      $region105: #{_backward.1} parent=5 // pred_region
        %s278 = ssub.s32 %s9, 1
        %s279 = sand.u32 %s60, 1
        %s280 = sand.u32 %s60, 1
        %s281 = smul.addr %s280, 16
        %s282 = scalar_lea.vmem [#allocation2], %s281
        // Predicated region
        $region107: #{_backward.1} parent=105 // pred_check
          %p283 = pneg %p73
        $region108: #{_backward.1} parent=105 // pred_check_branch
          %285 = sbr.rel (%p283) target = $region110
        $region109: #{_backward.1} parent=105 // pred_region
          _
        $region110: #{_backward.1} parent=105 // pred_fallthru
          _
        %s286 = sand.u32 %s88, 1
        %s287 = sand.u32 %s88, 1
        %s288 = smul.addr %s287, 8
        %s289 = scalar_lea.vmem [#allocation3], %s288
        // Predicated region
        $region111: #{_backward.1} parent=105 // pred_check
          %p290 = pneg %p101
        $region112: #{_backward.1} parent=105 // pred_check_branch
          %292 = sbr.rel (%p290) target = $region114
        $region113: #{_backward.1} parent=105 // pred_region
          _
        $region114: #{_backward.1} parent=105 // pred_fallthru
          _
        %s293 = smul.u32 2, %s19
        %p294 = scmp.lt.s32.totalorder %s293, 1
        %s295 = scalar_select %p294, %s293, 1
        %s296 = smul.addr %s295, 4
        %s297 = scalar_lea.vmem %s0, %s296
        %p298 = pneg %p47
        %p299 = pneg %p44
        %s300 = sand.u32 %s60, 1
        %s301 = sand.u32 %s60, 1
        %s302 = smul.addr %s301, 16
        %s303 = scalar_lea.vmem [#allocation2], %s302
        %p304 = pneg %p73
        %p305 = pneg %p70
        %s306 = sand.u32 %s88, 1
        %s307 = sand.u32 %s88, 1
        %s308 = smul.addr %s307, 8
        %s309 = scalar_lea.vmem [#allocation3], %s308
        %p310 = pneg %p101
        %p311 = pneg %p98
        %p312 = pneg %p129
        %p313 = pneg %p126
        %s314 = sand.u32 %s116, 1
        %s315 = sand.u32 %s116, 1
        %s316 = smul.addr %s315, 16
        %s317 = scalar_lea.vmem [#allocation4], %s316
        %s318 = smul.u32 2, %s19
        %p319 = scmp.lt.s32.totalorder %s318, 1
        %s320 = scalar_select %p319, %s318, 1
        %s321 = smul.addr %s320, 4
        %s322 = scalar_lea.vmem %s0, %s321
        %s323 = smul.u32 2, %s19
        %s324 = smul.u32 2, %s19
        %s325 = smul.u32 2, %s19
        %v327 = vld [vmem:[%s322] sm:$0xf]
        %v328 = vld [vmem:[%s322 + $0x4] sm:$0xf]
        %v329 = vld [vmem:[%s282] sm:$0xf]
        %v330 = vld [vmem:[%s282 + $0x4] sm:$0xf]
        %v331 = vld [vmem:[%s282 + $0x8] sm:$0xf]
        %v332 = vld [vmem:[%s282 + $0xc] sm:$0xf]
        %v333 = vld [vmem:[%s289] sm:$0xf]
        %v334 = vld [vmem:[%s289 + $0x4] sm:$0xf]
        %v335 = vunpack.c.l.bf16 %v333
        %v336 = vunpack.c.l.bf16 %v334
        %v339 = vunpack.c.l.b16 %v327
        %v340 = vunpack.c.l.b16 %v328
        %v341 = vpack.c.b16 %v340, %v339
        %v346 = vunpack.c.l.b16 %v329
        %v347 = vunpack.c.l.b16 %v330
        %v348 = vunpack.c.l.b16 %v331
        %v349 = vunpack.c.l.b16 %v332
        %v350 = vpack.c.b16 %v347, %v346
        %v351 = vpack.c.b16 %v349, %v348
        %vm354 = vcmask 261120
        %v356 = vsel %vm354, %v341, 0
        %358 = vmatprep.subr.bf16.mxu0 0
        %359 = vmatpush1.bf16.msra.mxu0 %v350
        %360 = vmatprep.subr.bf16.mxu0 0
        %361 = vmatpush1.bf16.msra.mxu0 %v351
        %362 = vmatprep.subr.bf16.mxu0 0
        %363 = vmatpush1.bf16.msra.mxu0 0
        %364 = vmatprep.subr.bf16.mxu0 0
        %365 = vmatpush1.bf16.msra.mxu0 0
        %366 = vmatprep.subr.bf16.mxu0 0
        %367 = vmatpush1.bf16.msra.mxu0 0
        %368 = vmatprep.subr.bf16.mxu0 0
        %369 = vmatpush1.bf16.msra.mxu0 0
        %370 = vmatprep.subr.bf16.mxu0 0
        %371 = vmatpush1.bf16.msra.mxu0 0
        %372 = vmatprep.subr.bf16.mxu0 0
        %373 = vmatpush1.bf16.msra.mxu0 0
        %374 = vmatprep.subr.bf16.mxu0 0
        %375 = vmatpush1.bf16.msra.mxu0 0
        %376 = vmatprep.subr.bf16.mxu0 0
        %377 = vmatpush1.bf16.msra.mxu0 0
        %378 = vmatprep.subr.bf16.mxu0 0
        %379 = vmatpush1.bf16.msra.mxu0 0
        %380 = vmatprep.subr.bf16.mxu0 0
        %381 = vmatpush1.bf16.msra.mxu0 0
        %382 = vmatprep.subr.bf16.mxu0 0
        %383 = vmatpush1.bf16.msra.mxu0 0
        %384 = vmatprep.subr.bf16.mxu0 0
        %385 = vmatpush1.bf16.msra.mxu0 0
        %386 = vmatprep.subr.bf16.mxu0 0
        %387 = vmatpush1.bf16.msra.mxu0 0
        %388 = vmatprep.subr.bf16.mxu0 0
        %389 = vmatpush1.bf16.msra.mxu0 0
        %390 = vmatprep.mubr.bf16.mxu0 0
        %391 = vmatmul.mubr.bf16.gmra.mrb[0].mxu0 %v356
        %v392 = vpop.f32.mrb[0].mxu0
        %v393 = vadd.f32 %v335, %v392
        %v394 = vpop.f32.mrb[0].mxu0
        %v395 = vpop.f32.mrb[0].mxu0
        %v396 = vadd.f32 %v336, %v395
        %v397 = vpop.f32.mrb[0].mxu0
        %398 = vdwg.mxu0
        %399 = vst [vmem:[%s317] sm:$0xff] %v393
        %400 = vst [vmem:[%s317 + $0x8] sm:$0xff] %v396
        %s401 = sand.u32 %s116, 1
        %s402 = sand.u32 %s116, 1
        %s403 = smul.addr %s402, 16
        %s404 = scalar_lea.vmem [#allocation4], %s403
        // Predicated region
        $region115: #{_backward.1} parent=105 // pred_check
          %p405 = pneg %p126
        $region116: #{_backward.1} parent=105 // pred_check_branch
          %407 = sbr.rel (%p405) target = $region118
        $region117: #{_backward.1} parent=105 // pred_region
          %s408 = smul.u32 2, %s19
          %s409 = smul.addr %s408, 2
          %s410 = sadd.s32 %s18, %s409
          %s411 = smul.addr %s410, 8
          %s412 = scalar_lea.vmem %s3, %s411
          // Predicated region
          $region119: #{_backward.1} parent=117 // pred_check
            _
          $region120: #{_backward.1} parent=117 // pred_check_branch
            %414 = sbr.rel (0) target = $region122
          $region121: #{_backward.1} parent=117 // pred_region
            // Predicated region
            $region123: #{_backward.1} parent=121 // pred_check
              _
            $region124: #{_backward.1} parent=121 // pred_check_branch
              %416 = sbr.rel (0) target = $region126
            $region125: #{_backward.1} parent=121 // pred_region
              // Predicated region
              $region138: #{_backward.1} parent=125 // pred_check
                _
              $region139: #{_backward.1} parent=125 // pred_check_branch
                %433 = sbr.rel (0) target = $region141
              $region140: #{_backward.1} parent=125 // pred_region
                loop: start=0, step=1, limit=1
                $region142: #{_backward.1} parent=140 // loop_pre_header
                  _
                $region143: #{_backward.1} parent=140 // loop_header
                  %s435 = sphi 0, %s439
                  %p436 = scmp.ge.s32.totalorder %s435, 1
                  %s440 = sphi %s404, %s404
                  %s441 = sphi %s412, %s412
                $region144: #{_backward.1} parent=140 // loop_header_branch
                  %438 = sbr.rel (%p436) target = $region148
                $region145: #{_backward.1} parent=140 // loop_body
                  %v442 = vld [vmem:[%s440] sm:$0xff]
                  %443 = vst [vmem:[%s441] sm:$0xff] %v442
                  %v444 = vld [vmem:[%s440 + $0x8] sm:$0xff]
                  %445 = vst [vmem:[%s441 + $0x10] sm:$0xff] %v444
                $region146: #{_backward.1} parent=140 // loop_footer
                  %s439 = sadd.s32 1, %s435
                $region147: #{_backward.1} parent=140 // loop_footer_branch
                  %434 = sbr.rel target = $region143
                $region148: #{_backward.1} parent=140 // loop_exit
                  _
              $region141: #{_backward.1} parent=125 // pred_fallthru
                _
              // Predicated region
              $region149: #{_backward.1} parent=125 // pred_check
                _
              $region150: #{_backward.1} parent=125 // pred_check_branch
                %447 = sbr.rel target = $region152
              $region151: #{_backward.1} parent=125 // pred_region
                _
              $region152: #{_backward.1} parent=125 // pred_fallthru
                _
            $region126: #{_backward.1} parent=121 // pred_fallthru
              _
            // Predicated region
            $region127: #{_backward.1} parent=121 // pred_check
              _
            $region128: #{_backward.1} parent=121 // pred_check_branch
              %418 = sbr.rel target = $region130
            $region129: #{_backward.1} parent=121 // pred_region
              loop: start=0, step=1, limit=1
              $region131: #{_backward.1} parent=129 // loop_pre_header
                _
              $region132: #{_backward.1} parent=129 // loop_header
                %s421 = sphi 0, %s425
                %p422 = scmp.ge.s32.totalorder %s421, 1
                %s426 = sphi %s404, %s404
                %s427 = sphi %s412, %s412
              $region133: #{_backward.1} parent=129 // loop_header_branch
                %424 = sbr.rel (%p422) target = $region137
              $region134: #{_backward.1} parent=129 // loop_body
                %v428 = vld [vmem:[%s426] sm:$0xff]
                %429 = vst [vmem:[%s427] sm:$0xff] %v428
                %v430 = vld [vmem:[%s426 + $0x8] sm:$0xff]
                %431 = vst [vmem:[%s427 + $0x10] sm:$0xff] %v430
              $region135: #{_backward.1} parent=129 // loop_footer
                %s425 = sadd.s32 1, %s421
              $region136: #{_backward.1} parent=129 // loop_footer_branch
                %420 = sbr.rel target = $region132
              $region137: #{_backward.1} parent=129 // loop_exit
                _
            $region130: #{_backward.1} parent=121 // pred_fallthru
              _
          $region122: #{_backward.1} parent=117 // pred_fallthru
            _
          %448 = vnop
        $region118: #{_backward.1} parent=105 // pred_fallthru
          _
      $region106: #{_backward.1} parent=5 // pred_fallthru
        _
      %p449 = scmp.le.s32.totalorder 2, %s9
      // Predicated region
      $region153: #{_backward.1} parent=5 // pred_check
        %p450 = pneg %p449
      $region154: #{_backward.1} parent=5 // pred_check_branch
        %452 = sbr.rel (%p450) target = $region156
      $region155: #{_backward.1} parent=5 // pred_region
        %s453 = ssub.s32 %s9, 2
        // Predicated region
        $region157: #{_backward.1} parent=155 // pred_check
          %p454 = pneg %p132
        $region158: #{_backward.1} parent=155 // pred_check_branch
          %456 = sbr.rel (%p454) target = $region160
        $region159: #{_backward.1} parent=155 // pred_region
          %s457 = sand.u32 %s117, 1
          %s458 = sand.u32 %s117, 1
          %s459 = smul.addr %s458, 16
          %s460 = scalar_lea.vmem [#allocation4], %s459
        $region160: #{_backward.1} parent=155 // pred_fallthru
          _
      $region156: #{_backward.1} parent=5 // pred_fallthru
        _
    $region6: #{_backward.1} parent=1 // loop_footer
      %s13 = sadd.s32 1, %s9
    $region7: #{_backward.1} parent=1 // loop_footer_branch
      %8 = sbr.rel target = $region3
    $region8: #{_backward.1} parent=1 // loop_exit
      _

</llo_original>
